<compile_context>
chip_gen: v5e
topology: v5e:2x2
jax: 0.10.0
libtpu: 0.0.40
codegen_flags: <defaults>
</compile_context>

<pallas_src>
import functools

import jax
import jax.numpy as jnp
from jax.experimental import pallas as pl
from jax.experimental.pallas import tpu as pltpu


def _embedding_gather_kernel(ids_ref, w_hbm, out_ref, row_buf, sems, *,
                             tokens_per_step):
    """Gather `tokens_per_step` weight rows with overlapping manual DMAs.

    ids_ref : SMEM scalar-prefetch ref, flattened (padded) token ids.
    w_hbm   : full (V, D) weight table, left in HBM (memory_space=pl.ANY).
    out_ref : (T, D) VMEM output tile for this grid step.
    row_buf : (T, D) VMEM scratch receiving the gathered rows.
    sems    : (T,) DMA semaphores, one per in-flight row copy.
    """
    i = pl.program_id(0)
    base = i * tokens_per_step

    # Issue all T row DMAs first so they are simultaneously in flight
    # (hides per-row HBM latency), then wait, then do one dense store.
    copies = []
    for t in range(tokens_per_step):          # static unroll, T is small
        row = ids_ref[base + t]
        cp = pltpu.make_async_copy(w_hbm.at[row], row_buf.at[t], sems.at[t])
        cp.start()
        copies.append(cp)
    for cp in copies:
        cp.wait()

    out_ref[...] = row_buf[...]


def embedding_forward(ids: jax.Array, weight: jax.Array, *,
                      tokens_per_step: int = 8) -> jax.Array:
    """F.embedding(ids, weight) with padding_idx=None, max_norm=None."""
    B, S = ids.shape
    V, D = weight.shape
    T = tokens_per_step                      # multiple of 8 -> dense f32 stores
    N = B * S
    n_steps = pl.cdiv(N, T)
    N_pad = n_steps * T

    flat_ids = ids.reshape(N).astype(jnp.int32)
    if N_pad != N:
        # Pad with a valid id (0); padded rows are sliced off below.
        flat_ids = jnp.pad(flat_ids, (0, N_pad - N))

    kernel = functools.partial(_embedding_gather_kernel, tokens_per_step=T)

    out_flat = pl.pallas_call(
        kernel,
        out_shape=jax.ShapeDtypeStruct((N_pad, D), weight.dtype),
        grid_spec=pltpu.PrefetchScalarGridSpec(
            num_scalar_prefetch=1,           # flat_ids lands in SMEM
            grid=(n_steps,),                 # one grid step per T-token tile
            in_specs=[
                # Weight table stays in HBM; rows are gathered by manual DMA.
                pl.BlockSpec(memory_space=pl.ANY),
            ],
            out_specs=pl.BlockSpec((T, D), lambda i, ids: (i, 0)),
            scratch_shapes=[
                pltpu.VMEM((T, D), weight.dtype),     # gathered-rows buffer
                pltpu.SemaphoreType.DMA((T,)),        # one sem per row DMA
            ],
        ),
        compiler_params=pltpu.CompilerParams(
            dimension_semantics=("parallel",)),       # lets v7x split across TCs
    )(flat_ids, weight)

    return out_flat[:N].reshape(B, S, D)


if __name__ == "__main__":
    # Deterministic synthetic parameters / inputs (small shapes).
    num_embeddings = 64     # vocabulary size
    embedding_dim = 128     # hidden size
    batch, seq = 2, 8

    key = jax.random.PRNGKey(0)
    k_w, k_ids, k_ids2 = jax.random.split(key, 3)

    # Module __init__ allocates weight of shape (num_embeddings, embedding_dim);
    # initialize it deterministically here (normal init).
    weight = jax.random.normal(k_w, (num_embeddings, embedding_dim),
                               dtype=jnp.float32)
    ids = jax.random.randint(k_ids, (batch, seq), 0, num_embeddings,
                             dtype=jnp.int32)

    out = embedding_forward(ids, weight)
    out = jax.block_until_ready(out)

    ref = jnp.take(weight, ids, axis=0)
    assert out.shape == (batch, seq, embedding_dim)
    assert out.dtype == jnp.float32
    assert bool(jnp.array_equal(out, ref))

    # Second check: token count not a multiple of the tile size (exercises the
    # padding path).
    ids_odd = jax.random.randint(k_ids2, (batch, 5), 0, num_embeddings,
                                 dtype=jnp.int32)
    out_odd = jax.block_until_ready(embedding_forward(ids_odd, weight))
    ref_odd = jnp.take(weight, ids_odd, axis=0)
    assert bool(jnp.array_equal(out_odd, ref_odd))

    print("KERNEL_OK")
</pallas_src>

<mosaic_0001>
module attributes {stable_mosaic.version = 11 : i64} {
  func.func @_embedding_gather_kernel(%arg0: i32, %arg1: memref<16xi32, #tpu.memory_space<smem>>, %arg2: memref<64x128xf32, #tpu.memory_space<any>>, %arg3: memref<8x128xf32, #tpu.memory_space<vmem>>, %arg4: memref<8x128xf32, #tpu.memory_space<vmem>>, %arg5: memref<8x!tpu.dma_semaphore, #tpu.memory_space<semaphore_mem>>) attributes {dimension_semantics = [#tpu.dimension_semantics<parallel>], iteration_bounds = array<i64: 2>, scalar_prefetch = 1 : i64, scratch_operands = 2 : i64, tpu.core_type = #tpu.core_type<tc>, window_params = [{}, {transform_indices = @transform_1, window_bounds = array<i64: 8, 128>}]} {
    %c8_i32 = arith.constant 8 : i32
    %0 = arith.muli %arg0, %c8_i32 : i32
    %c0_i32 = arith.constant 0 : i32
    %1 = arith.addi %0, %c0_i32 : i32
    %2 = arith.index_cast %1 : i32 to index
    %3 = memref.load %arg1[%2] : memref<16xi32, #tpu.memory_space<smem>>
    %c0_i32_0 = arith.constant 0 : i32
    %c0_i32_1 = arith.constant 0 : i32
    %c0_i32_2 = arith.constant 0 : i32
    %4 = tpu.memref_slice %arg2[%3, %c0_i32_2] : memref<64x128xf32, #tpu.memory_space<any>> -> memref<1x128xf32, #tpu.memory_space<any>>
    %5 = tpu.memref_squeeze %4 : memref<1x128xf32, #tpu.memory_space<any>> -> memref<128xf32, #tpu.memory_space<any>>
    %c0_i32_3 = arith.constant 0 : i32
    %6 = tpu.memref_slice %arg4[%c0_i32_0, %c0_i32_3] : memref<8x128xf32, #tpu.memory_space<vmem>> -> memref<1x128xf32, #tpu.memory_space<vmem>>
    %7 = tpu.memref_squeeze %6 : memref<1x128xf32, #tpu.memory_space<vmem>> -> memref<128xf32, #tpu.memory_space<vmem>>
    %8 = tpu.memref_slice %arg5[%c0_i32_1] : memref<8x!tpu.dma_semaphore, #tpu.memory_space<semaphore_mem>> -> memref<1x!tpu.dma_semaphore, #tpu.memory_space<semaphore_mem>>
    %9 = tpu.memref_squeeze %8 : memref<1x!tpu.dma_semaphore, #tpu.memory_space<semaphore_mem>> -> memref<!tpu.dma_semaphore, #tpu.memory_space<semaphore_mem>>
    tpu.enqueue_dma source(%5 : memref<128xf32, #tpu.memory_space<any>>) target(%7 : memref<128xf32, #tpu.memory_space<vmem>>) target_semaphore(%9 : memref<!tpu.dma_semaphore, #tpu.memory_space<semaphore_mem>>)
    %c1_i32 = arith.constant 1 : i32
    %10 = arith.addi %0, %c1_i32 : i32
    %11 = arith.index_cast %10 : i32 to index
    %12 = memref.load %arg1[%11] : memref<16xi32, #tpu.memory_space<smem>>
    %c1_i32_4 = arith.constant 1 : i32
    %c1_i32_5 = arith.constant 1 : i32
    %c0_i32_6 = arith.constant 0 : i32
    %13 = tpu.memref_slice %arg2[%12, %c0_i32_6] : memref<64x128xf32, #tpu.memory_space<any>> -> memref<1x128xf32, #tpu.memory_space<any>>
    %14 = tpu.memref_squeeze %13 : memref<1x128xf32, #tpu.memory_space<any>> -> memref<128xf32, #tpu.memory_space<any>>
    %c0_i32_7 = arith.constant 0 : i32
    %15 = tpu.memref_slice %arg4[%c1_i32_4, %c0_i32_7] : memref<8x128xf32, #tpu.memory_space<vmem>> -> memref<1x128xf32, #tpu.memory_space<vmem>>
    %16 = tpu.memref_squeeze %15 : memref<1x128xf32, #tpu.memory_space<vmem>> -> memref<128xf32, #tpu.memory_space<vmem>>
    %17 = tpu.memref_slice %arg5[%c1_i32_5] : memref<8x!tpu.dma_semaphore, #tpu.memory_space<semaphore_mem>> -> memref<1x!tpu.dma_semaphore, #tpu.memory_space<semaphore_mem>>
    %18 = tpu.memref_squeeze %17 : memref<1x!tpu.dma_semaphore, #tpu.memory_space<semaphore_mem>> -> memref<!tpu.dma_semaphore, #tpu.memory_space<semaphore_mem>>
    tpu.enqueue_dma source(%14 : memref<128xf32, #tpu.memory_space<any>>) target(%16 : memref<128xf32, #tpu.memory_space<vmem>>) target_semaphore(%18 : memref<!tpu.dma_semaphore, #tpu.memory_space<semaphore_mem>>)
    %c2_i32 = arith.constant 2 : i32
    %19 = arith.addi %0, %c2_i32 : i32
    %20 = arith.index_cast %19 : i32 to index
    %21 = memref.load %arg1[%20] : memref<16xi32, #tpu.memory_space<smem>>
    %c2_i32_8 = arith.constant 2 : i32
    %c2_i32_9 = arith.constant 2 : i32
    %c0_i32_10 = arith.constant 0 : i32
    %22 = tpu.memref_slice %arg2[%21, %c0_i32_10] : memref<64x128xf32, #tpu.memory_space<any>> -> memref<1x128xf32, #tpu.memory_space<any>>
    %23 = tpu.memref_squeeze %22 : memref<1x128xf32, #tpu.memory_space<any>> -> memref<128xf32, #tpu.memory_space<any>>
    %c0_i32_11 = arith.constant 0 : i32
    %24 = tpu.memref_slice %arg4[%c2_i32_8, %c0_i32_11] : memref<8x128xf32, #tpu.memory_space<vmem>> -> memref<1x128xf32, #tpu.memory_space<vmem>>
    %25 = tpu.memref_squeeze %24 : memref<1x128xf32, #tpu.memory_space<vmem>> -> memref<128xf32, #tpu.memory_space<vmem>>
    %26 = tpu.memref_slice %arg5[%c2_i32_9] : memref<8x!tpu.dma_semaphore, #tpu.memory_space<semaphore_mem>> -> memref<1x!tpu.dma_semaphore, #tpu.memory_space<semaphore_mem>>
    %27 = tpu.memref_squeeze %26 : memref<1x!tpu.dma_semaphore, #tpu.memory_space<semaphore_mem>> -> memref<!tpu.dma_semaphore, #tpu.memory_space<semaphore_mem>>
    tpu.enqueue_dma source(%23 : memref<128xf32, #tpu.memory_space<any>>) target(%25 : memref<128xf32, #tpu.memory_space<vmem>>) target_semaphore(%27 : memref<!tpu.dma_semaphore, #tpu.memory_space<semaphore_mem>>)
    %c3_i32 = arith.constant 3 : i32
    %28 = arith.addi %0, %c3_i32 : i32
    %29 = arith.index_cast %28 : i32 to index
    %30 = memref.load %arg1[%29] : memref<16xi32, #tpu.memory_space<smem>>
    %c3_i32_12 = arith.constant 3 : i32
    %c3_i32_13 = arith.constant 3 : i32
    %c0_i32_14 = arith.constant 0 : i32
    %31 = tpu.memref_slice %arg2[%30, %c0_i32_14] : memref<64x128xf32, #tpu.memory_space<any>> -> memref<1x128xf32, #tpu.memory_space<any>>
    %32 = tpu.memref_squeeze %31 : memref<1x128xf32, #tpu.memory_space<any>> -> memref<128xf32, #tpu.memory_space<any>>
    %c0_i32_15 = arith.constant 0 : i32
    %33 = tpu.memref_slice %arg4[%c3_i32_12, %c0_i32_15] : memref<8x128xf32, #tpu.memory_space<vmem>> -> memref<1x128xf32, #tpu.memory_space<vmem>>
    %34 = tpu.memref_squeeze %33 : memref<1x128xf32, #tpu.memory_space<vmem>> -> memref<128xf32, #tpu.memory_space<vmem>>
    %35 = tpu.memref_slice %arg5[%c3_i32_13] : memref<8x!tpu.dma_semaphore, #tpu.memory_space<semaphore_mem>> -> memref<1x!tpu.dma_semaphore, #tpu.memory_space<semaphore_mem>>
    %36 = tpu.memref_squeeze %35 : memref<1x!tpu.dma_semaphore, #tpu.memory_space<semaphore_mem>> -> memref<!tpu.dma_semaphore, #tpu.memory_space<semaphore_mem>>
    tpu.enqueue_dma source(%32 : memref<128xf32, #tpu.memory_space<any>>) target(%34 : memref<128xf32, #tpu.memory_space<vmem>>) target_semaphore(%36 : memref<!tpu.dma_semaphore, #tpu.memory_space<semaphore_mem>>)
    %c4_i32 = arith.constant 4 : i32
    %37 = arith.addi %0, %c4_i32 : i32
    %38 = arith.index_cast %37 : i32 to index
    %39 = memref.load %arg1[%38] : memref<16xi32, #tpu.memory_space<smem>>
    %c4_i32_16 = arith.constant 4 : i32
    %c4_i32_17 = arith.constant 4 : i32
    %c0_i32_18 = arith.constant 0 : i32
    %40 = tpu.memref_slice %arg2[%39, %c0_i32_18] : memref<64x128xf32, #tpu.memory_space<any>> -> memref<1x128xf32, #tpu.memory_space<any>>
    %41 = tpu.memref_squeeze %40 : memref<1x128xf32, #tpu.memory_space<any>> -> memref<128xf32, #tpu.memory_space<any>>
    %c0_i32_19 = arith.constant 0 : i32
    %42 = tpu.memref_slice %arg4[%c4_i32_16, %c0_i32_19] : memref<8x128xf32, #tpu.memory_space<vmem>> -> memref<1x128xf32, #tpu.memory_space<vmem>>
    %43 = tpu.memref_squeeze %42 : memref<1x128xf32, #tpu.memory_space<vmem>> -> memref<128xf32, #tpu.memory_space<vmem>>
    %44 = tpu.memref_slice %arg5[%c4_i32_17] : memref<8x!tpu.dma_semaphore, #tpu.memory_space<semaphore_mem>> -> memref<1x!tpu.dma_semaphore, #tpu.memory_space<semaphore_mem>>
    %45 = tpu.memref_squeeze %44 : memref<1x!tpu.dma_semaphore, #tpu.memory_space<semaphore_mem>> -> memref<!tpu.dma_semaphore, #tpu.memory_space<semaphore_mem>>
    tpu.enqueue_dma source(%41 : memref<128xf32, #tpu.memory_space<any>>) target(%43 : memref<128xf32, #tpu.memory_space<vmem>>) target_semaphore(%45 : memref<!tpu.dma_semaphore, #tpu.memory_space<semaphore_mem>>)
    %c5_i32 = arith.constant 5 : i32
    %46 = arith.addi %0, %c5_i32 : i32
    %47 = arith.index_cast %46 : i32 to index
    %48 = memref.load %arg1[%47] : memref<16xi32, #tpu.memory_space<smem>>
    %c5_i32_20 = arith.constant 5 : i32
    %c5_i32_21 = arith.constant 5 : i32
    %c0_i32_22 = arith.constant 0 : i32
    %49 = tpu.memref_slice %arg2[%48, %c0_i32_22] : memref<64x128xf32, #tpu.memory_space<any>> -> memref<1x128xf32, #tpu.memory_space<any>>
    %50 = tpu.memref_squeeze %49 : memref<1x128xf32, #tpu.memory_space<any>> -> memref<128xf32, #tpu.memory_space<any>>
    %c0_i32_23 = arith.constant 0 : i32
    %51 = tpu.memref_slice %arg4[%c5_i32_20, %c0_i32_23] : memref<8x128xf32, #tpu.memory_space<vmem>> -> memref<1x128xf32, #tpu.memory_space<vmem>>
    %52 = tpu.memref_squeeze %51 : memref<1x128xf32, #tpu.memory_space<vmem>> -> memref<128xf32, #tpu.memory_space<vmem>>
    %53 = tpu.memref_slice %arg5[%c5_i32_21] : memref<8x!tpu.dma_semaphore, #tpu.memory_space<semaphore_mem>> -> memref<1x!tpu.dma_semaphore, #tpu.memory_space<semaphore_mem>>
    %54 = tpu.memref_squeeze %53 : memref<1x!tpu.dma_semaphore, #tpu.memory_space<semaphore_mem>> -> memref<!tpu.dma_semaphore, #tpu.memory_space<semaphore_mem>>
    tpu.enqueue_dma source(%50 : memref<128xf32, #tpu.memory_space<any>>) target(%52 : memref<128xf32, #tpu.memory_space<vmem>>) target_semaphore(%54 : memref<!tpu.dma_semaphore, #tpu.memory_space<semaphore_mem>>)
    %c6_i32 = arith.constant 6 : i32
    %55 = arith.addi %0, %c6_i32 : i32
    %56 = arith.index_cast %55 : i32 to index
    %57 = memref.load %arg1[%56] : memref<16xi32, #tpu.memory_space<smem>>
    %c6_i32_24 = arith.constant 6 : i32
    %c6_i32_25 = arith.constant 6 : i32
    %c0_i32_26 = arith.constant 0 : i32
    %58 = tpu.memref_slice %arg2[%57, %c0_i32_26] : memref<64x128xf32, #tpu.memory_space<any>> -> memref<1x128xf32, #tpu.memory_space<any>>
    %59 = tpu.memref_squeeze %58 : memref<1x128xf32, #tpu.memory_space<any>> -> memref<128xf32, #tpu.memory_space<any>>
    %c0_i32_27 = arith.constant 0 : i32
    %60 = tpu.memref_slice %arg4[%c6_i32_24, %c0_i32_27] : memref<8x128xf32, #tpu.memory_space<vmem>> -> memref<1x128xf32, #tpu.memory_space<vmem>>
    %61 = tpu.memref_squeeze %60 : memref<1x128xf32, #tpu.memory_space<vmem>> -> memref<128xf32, #tpu.memory_space<vmem>>
    %62 = tpu.memref_slice %arg5[%c6_i32_25] : memref<8x!tpu.dma_semaphore, #tpu.memory_space<semaphore_mem>> -> memref<1x!tpu.dma_semaphore, #tpu.memory_space<semaphore_mem>>
    %63 = tpu.memref_squeeze %62 : memref<1x!tpu.dma_semaphore, #tpu.memory_space<semaphore_mem>> -> memref<!tpu.dma_semaphore, #tpu.memory_space<semaphore_mem>>
    tpu.enqueue_dma source(%59 : memref<128xf32, #tpu.memory_space<any>>) target(%61 : memref<128xf32, #tpu.memory_space<vmem>>) target_semaphore(%63 : memref<!tpu.dma_semaphore, #tpu.memory_space<semaphore_mem>>)
    %c7_i32 = arith.constant 7 : i32
    %64 = arith.addi %0, %c7_i32 : i32
    %65 = arith.index_cast %64 : i32 to index
    %66 = memref.load %arg1[%65] : memref<16xi32, #tpu.memory_space<smem>>
    %c7_i32_28 = arith.constant 7 : i32
    %c7_i32_29 = arith.constant 7 : i32
    %c0_i32_30 = arith.constant 0 : i32
    %67 = tpu.memref_slice %arg2[%66, %c0_i32_30] : memref<64x128xf32, #tpu.memory_space<any>> -> memref<1x128xf32, #tpu.memory_space<any>>
    %68 = tpu.memref_squeeze %67 : memref<1x128xf32, #tpu.memory_space<any>> -> memref<128xf32, #tpu.memory_space<any>>
    %c0_i32_31 = arith.constant 0 : i32
    %69 = tpu.memref_slice %arg4[%c7_i32_28, %c0_i32_31] : memref<8x128xf32, #tpu.memory_space<vmem>> -> memref<1x128xf32, #tpu.memory_space<vmem>>
    %70 = tpu.memref_squeeze %69 : memref<1x128xf32, #tpu.memory_space<vmem>> -> memref<128xf32, #tpu.memory_space<vmem>>
    %71 = tpu.memref_slice %arg5[%c7_i32_29] : memref<8x!tpu.dma_semaphore, #tpu.memory_space<semaphore_mem>> -> memref<1x!tpu.dma_semaphore, #tpu.memory_space<semaphore_mem>>
    %72 = tpu.memref_squeeze %71 : memref<1x!tpu.dma_semaphore, #tpu.memory_space<semaphore_mem>> -> memref<!tpu.dma_semaphore, #tpu.memory_space<semaphore_mem>>
    tpu.enqueue_dma source(%68 : memref<128xf32, #tpu.memory_space<any>>) target(%70 : memref<128xf32, #tpu.memory_space<vmem>>) target_semaphore(%72 : memref<!tpu.dma_semaphore, #tpu.memory_space<semaphore_mem>>)
    %c0_i32_32 = arith.constant 0 : i32
    %c0_i32_33 = arith.constant 0 : i32
    %c0_i32_34 = arith.constant 0 : i32
    %73 = tpu.memref_slice %arg2[%3, %c0_i32_34] : memref<64x128xf32, #tpu.memory_space<any>> -> memref<1x128xf32, #tpu.memory_space<any>>
    %74 = tpu.memref_squeeze %73 : memref<1x128xf32, #tpu.memory_space<any>> -> memref<128xf32, #tpu.memory_space<any>>
    %c0_i32_35 = arith.constant 0 : i32
    %75 = tpu.memref_slice %arg4[%c0_i32_32, %c0_i32_35] : memref<8x128xf32, #tpu.memory_space<vmem>> -> memref<1x128xf32, #tpu.memory_space<vmem>>
    %76 = tpu.memref_squeeze %75 : memref<1x128xf32, #tpu.memory_space<vmem>> -> memref<128xf32, #tpu.memory_space<vmem>>
    %77 = tpu.memref_slice %arg5[%c0_i32_33] : memref<8x!tpu.dma_semaphore, #tpu.memory_space<semaphore_mem>> -> memref<1x!tpu.dma_semaphore, #tpu.memory_space<semaphore_mem>>
    %78 = tpu.memref_squeeze %77 : memref<1x!tpu.dma_semaphore, #tpu.memory_space<semaphore_mem>> -> memref<!tpu.dma_semaphore, #tpu.memory_space<semaphore_mem>>
    tpu.wait_dma2 semaphore(%78 : memref<!tpu.dma_semaphore, #tpu.memory_space<semaphore_mem>>) src(%74 : memref<128xf32, #tpu.memory_space<any>>) dst(%76 : memref<128xf32, #tpu.memory_space<vmem>>)
    %c1_i32_36 = arith.constant 1 : i32
    %c1_i32_37 = arith.constant 1 : i32
    %c0_i32_38 = arith.constant 0 : i32
    %79 = tpu.memref_slice %arg2[%12, %c0_i32_38] : memref<64x128xf32, #tpu.memory_space<any>> -> memref<1x128xf32, #tpu.memory_space<any>>
    %80 = tpu.memref_squeeze %79 : memref<1x128xf32, #tpu.memory_space<any>> -> memref<128xf32, #tpu.memory_space<any>>
    %c0_i32_39 = arith.constant 0 : i32
    %81 = tpu.memref_slice %arg4[%c1_i32_36, %c0_i32_39] : memref<8x128xf32, #tpu.memory_space<vmem>> -> memref<1x128xf32, #tpu.memory_space<vmem>>
    %82 = tpu.memref_squeeze %81 : memref<1x128xf32, #tpu.memory_space<vmem>> -> memref<128xf32, #tpu.memory_space<vmem>>
    %83 = tpu.memref_slice %arg5[%c1_i32_37] : memref<8x!tpu.dma_semaphore, #tpu.memory_space<semaphore_mem>> -> memref<1x!tpu.dma_semaphore, #tpu.memory_space<semaphore_mem>>
    %84 = tpu.memref_squeeze %83 : memref<1x!tpu.dma_semaphore, #tpu.memory_space<semaphore_mem>> -> memref<!tpu.dma_semaphore, #tpu.memory_space<semaphore_mem>>
    tpu.wait_dma2 semaphore(%84 : memref<!tpu.dma_semaphore, #tpu.memory_space<semaphore_mem>>) src(%80 : memref<128xf32, #tpu.memory_space<any>>) dst(%82 : memref<128xf32, #tpu.memory_space<vmem>>)
    %c2_i32_40 = arith.constant 2 : i32
    %c2_i32_41 = arith.constant 2 : i32
    %c0_i32_42 = arith.constant 0 : i32
    %85 = tpu.memref_slice %arg2[%21, %c0_i32_42] : memref<64x128xf32, #tpu.memory_space<any>> -> memref<1x128xf32, #tpu.memory_space<any>>
    %86 = tpu.memref_squeeze %85 : memref<1x128xf32, #tpu.memory_space<any>> -> memref<128xf32, #tpu.memory_space<any>>
    %c0_i32_43 = arith.constant 0 : i32
    %87 = tpu.memref_slice %arg4[%c2_i32_40, %c0_i32_43] : memref<8x128xf32, #tpu.memory_space<vmem>> -> memref<1x128xf32, #tpu.memory_space<vmem>>
    %88 = tpu.memref_squeeze %87 : memref<1x128xf32, #tpu.memory_space<vmem>> -> memref<128xf32, #tpu.memory_space<vmem>>
    %89 = tpu.memref_slice %arg5[%c2_i32_41] : memref<8x!tpu.dma_semaphore, #tpu.memory_space<semaphore_mem>> -> memref<1x!tpu.dma_semaphore, #tpu.memory_space<semaphore_mem>>
    %90 = tpu.memref_squeeze %89 : memref<1x!tpu.dma_semaphore, #tpu.memory_space<semaphore_mem>> -> memref<!tpu.dma_semaphore, #tpu.memory_space<semaphore_mem>>
    tpu.wait_dma2 semaphore(%90 : memref<!tpu.dma_semaphore, #tpu.memory_space<semaphore_mem>>) src(%86 : memref<128xf32, #tpu.memory_space<any>>) dst(%88 : memref<128xf32, #tpu.memory_space<vmem>>)
    %c3_i32_44 = arith.constant 3 : i32
    %c3_i32_45 = arith.constant 3 : i32
    %c0_i32_46 = arith.constant 0 : i32
    %91 = tpu.memref_slice %arg2[%30, %c0_i32_46] : memref<64x128xf32, #tpu.memory_space<any>> -> memref<1x128xf32, #tpu.memory_space<any>>
    %92 = tpu.memref_squeeze %91 : memref<1x128xf32, #tpu.memory_space<any>> -> memref<128xf32, #tpu.memory_space<any>>
    %c0_i32_47 = arith.constant 0 : i32
    %93 = tpu.memref_slice %arg4[%c3_i32_44, %c0_i32_47] : memref<8x128xf32, #tpu.memory_space<vmem>> -> memref<1x128xf32, #tpu.memory_space<vmem>>
    %94 = tpu.memref_squeeze %93 : memref<1x128xf32, #tpu.memory_space<vmem>> -> memref<128xf32, #tpu.memory_space<vmem>>
    %95 = tpu.memref_slice %arg5[%c3_i32_45] : memref<8x!tpu.dma_semaphore, #tpu.memory_space<semaphore_mem>> -> memref<1x!tpu.dma_semaphore, #tpu.memory_space<semaphore_mem>>
    %96 = tpu.memref_squeeze %95 : memref<1x!tpu.dma_semaphore, #tpu.memory_space<semaphore_mem>> -> memref<!tpu.dma_semaphore, #tpu.memory_space<semaphore_mem>>
    tpu.wait_dma2 semaphore(%96 : memref<!tpu.dma_semaphore, #tpu.memory_space<semaphore_mem>>) src(%92 : memref<128xf32, #tpu.memory_space<any>>) dst(%94 : memref<128xf32, #tpu.memory_space<vmem>>)
    %c4_i32_48 = arith.constant 4 : i32
    %c4_i32_49 = arith.constant 4 : i32
    %c0_i32_50 = arith.constant 0 : i32
    %97 = tpu.memref_slice %arg2[%39, %c0_i32_50] : memref<64x128xf32, #tpu.memory_space<any>> -> memref<1x128xf32, #tpu.memory_space<any>>
    %98 = tpu.memref_squeeze %97 : memref<1x128xf32, #tpu.memory_space<any>> -> memref<128xf32, #tpu.memory_space<any>>
    %c0_i32_51 = arith.constant 0 : i32
    %99 = tpu.memref_slice %arg4[%c4_i32_48, %c0_i32_51] : memref<8x128xf32, #tpu.memory_space<vmem>> -> memref<1x128xf32, #tpu.memory_space<vmem>>
    %100 = tpu.memref_squeeze %99 : memref<1x128xf32, #tpu.memory_space<vmem>> -> memref<128xf32, #tpu.memory_space<vmem>>
    %101 = tpu.memref_slice %arg5[%c4_i32_49] : memref<8x!tpu.dma_semaphore, #tpu.memory_space<semaphore_mem>> -> memref<1x!tpu.dma_semaphore, #tpu.memory_space<semaphore_mem>>
    %102 = tpu.memref_squeeze %101 : memref<1x!tpu.dma_semaphore, #tpu.memory_space<semaphore_mem>> -> memref<!tpu.dma_semaphore, #tpu.memory_space<semaphore_mem>>
    tpu.wait_dma2 semaphore(%102 : memref<!tpu.dma_semaphore, #tpu.memory_space<semaphore_mem>>) src(%98 : memref<128xf32, #tpu.memory_space<any>>) dst(%100 : memref<128xf32, #tpu.memory_space<vmem>>)
    %c5_i32_52 = arith.constant 5 : i32
    %c5_i32_53 = arith.constant 5 : i32
    %c0_i32_54 = arith.constant 0 : i32
    %103 = tpu.memref_slice %arg2[%48, %c0_i32_54] : memref<64x128xf32, #tpu.memory_space<any>> -> memref<1x128xf32, #tpu.memory_space<any>>
    %104 = tpu.memref_squeeze %103 : memref<1x128xf32, #tpu.memory_space<any>> -> memref<128xf32, #tpu.memory_space<any>>
    %c0_i32_55 = arith.constant 0 : i32
    %105 = tpu.memref_slice %arg4[%c5_i32_52, %c0_i32_55] : memref<8x128xf32, #tpu.memory_space<vmem>> -> memref<1x128xf32, #tpu.memory_space<vmem>>
    %106 = tpu.memref_squeeze %105 : memref<1x128xf32, #tpu.memory_space<vmem>> -> memref<128xf32, #tpu.memory_space<vmem>>
    %107 = tpu.memref_slice %arg5[%c5_i32_53] : memref<8x!tpu.dma_semaphore, #tpu.memory_space<semaphore_mem>> -> memref<1x!tpu.dma_semaphore, #tpu.memory_space<semaphore_mem>>
    %108 = tpu.memref_squeeze %107 : memref<1x!tpu.dma_semaphore, #tpu.memory_space<semaphore_mem>> -> memref<!tpu.dma_semaphore, #tpu.memory_space<semaphore_mem>>
    tpu.wait_dma2 semaphore(%108 : memref<!tpu.dma_semaphore, #tpu.memory_space<semaphore_mem>>) src(%104 : memref<128xf32, #tpu.memory_space<any>>) dst(%106 : memref<128xf32, #tpu.memory_space<vmem>>)
    %c6_i32_56 = arith.constant 6 : i32
    %c6_i32_57 = arith.constant 6 : i32
    %c0_i32_58 = arith.constant 0 : i32
    %109 = tpu.memref_slice %arg2[%57, %c0_i32_58] : memref<64x128xf32, #tpu.memory_space<any>> -> memref<1x128xf32, #tpu.memory_space<any>>
    %110 = tpu.memref_squeeze %109 : memref<1x128xf32, #tpu.memory_space<any>> -> memref<128xf32, #tpu.memory_space<any>>
    %c0_i32_59 = arith.constant 0 : i32
    %111 = tpu.memref_slice %arg4[%c6_i32_56, %c0_i32_59] : memref<8x128xf32, #tpu.memory_space<vmem>> -> memref<1x128xf32, #tpu.memory_space<vmem>>
    %112 = tpu.memref_squeeze %111 : memref<1x128xf32, #tpu.memory_space<vmem>> -> memref<128xf32, #tpu.memory_space<vmem>>
    %113 = tpu.memref_slice %arg5[%c6_i32_57] : memref<8x!tpu.dma_semaphore, #tpu.memory_space<semaphore_mem>> -> memref<1x!tpu.dma_semaphore, #tpu.memory_space<semaphore_mem>>
    %114 = tpu.memref_squeeze %113 : memref<1x!tpu.dma_semaphore, #tpu.memory_space<semaphore_mem>> -> memref<!tpu.dma_semaphore, #tpu.memory_space<semaphore_mem>>
    tpu.wait_dma2 semaphore(%114 : memref<!tpu.dma_semaphore, #tpu.memory_space<semaphore_mem>>) src(%110 : memref<128xf32, #tpu.memory_space<any>>) dst(%112 : memref<128xf32, #tpu.memory_space<vmem>>)
    %c7_i32_60 = arith.constant 7 : i32
    %c7_i32_61 = arith.constant 7 : i32
    %c0_i32_62 = arith.constant 0 : i32
    %115 = tpu.memref_slice %arg2[%66, %c0_i32_62] : memref<64x128xf32, #tpu.memory_space<any>> -> memref<1x128xf32, #tpu.memory_space<any>>
    %116 = tpu.memref_squeeze %115 : memref<1x128xf32, #tpu.memory_space<any>> -> memref<128xf32, #tpu.memory_space<any>>
    %c0_i32_63 = arith.constant 0 : i32
    %117 = tpu.memref_slice %arg4[%c7_i32_60, %c0_i32_63] : memref<8x128xf32, #tpu.memory_space<vmem>> -> memref<1x128xf32, #tpu.memory_space<vmem>>
    %118 = tpu.memref_squeeze %117 : memref<1x128xf32, #tpu.memory_space<vmem>> -> memref<128xf32, #tpu.memory_space<vmem>>
    %119 = tpu.memref_slice %arg5[%c7_i32_61] : memref<8x!tpu.dma_semaphore, #tpu.memory_space<semaphore_mem>> -> memref<1x!tpu.dma_semaphore, #tpu.memory_space<semaphore_mem>>
    %120 = tpu.memref_squeeze %119 : memref<1x!tpu.dma_semaphore, #tpu.memory_space<semaphore_mem>> -> memref<!tpu.dma_semaphore, #tpu.memory_space<semaphore_mem>>
    tpu.wait_dma2 semaphore(%120 : memref<!tpu.dma_semaphore, #tpu.memory_space<semaphore_mem>>) src(%116 : memref<128xf32, #tpu.memory_space<any>>) dst(%118 : memref<128xf32, #tpu.memory_space<vmem>>)
    %c0 = arith.constant 0 : index
    %c0_64 = arith.constant 0 : index
    %121 = vector.load %arg4[%c0, %c0_64] : memref<8x128xf32, #tpu.memory_space<vmem>>, vector<8x128xf32>
    %c0_65 = arith.constant 0 : index
    %c0_66 = arith.constant 0 : index
    %122 = vector.load %arg3[%c0_65, %c0_66] : memref<8x128xf32, #tpu.memory_space<vmem>>, vector<8x128xf32>
    tpu.vector_store %arg3[%c0_65, %c0_66], %121 {strides = array<i32>} : memref<8x128xf32, #tpu.memory_space<vmem>>, vector<8x128xf32>,
    return
  }
  func.func @transform_1(%arg0: i32, %arg1: memref<16xi32, #tpu.memory_space<smem>>) -> (i32, i32) {
    %c0_i32 = arith.constant 0 : i32
    %c0_i32_0 = arith.constant 0 : i32
    return %arg0, %c0_i32 : i32, i32
  }
}

</mosaic_0001>

<llo_original>
// kernel: tpu_custom_call.1
$region0: #{tpu_custom_call.1}
  #allocation0 [shape = 'u32[]', space=smem, size = 0x4, offset = 0x4, fixed_abs, tag = 'smem constant byte address 0x4 - core index']
  #allocation1 [shape = 'u32[72,128]{1,0:T(1,128)}', space=vmem, size = 0x9000, scoped, tag = 'internal scratch']
  #allocation2 [shape = 'f32[8,128]{1,0:T(8,128)}', space=vmem, size = 0x1000, scoped, tag = 'scratch operand']
  #allocation3 [shape = 's32[8]{0}', space=sflag, size = 0x20, scoped, tag = 'scratch operand']
  #allocation4 [shape = 's32[1]{0}', space=sflag, size = 0x4, scoped, tag = 'scoped memory for tpu_custom_call.1']
  #allocation5 [shape = 'u8[512]{0}', space=smem, size = 0x200, scoped, tag = 'prefetched SMEM operand 0']
  #allocation8 [shape = 's32[]', space=sflag, size = 0x4, offset = 0, fixed_abs, tag = 'sflag constant byte address 0x0 - dummy sync flag']
  #allocation9 [shape = 's32[]', space=sflag, size = 0x4, offset = 0, fixed_abs, tag = 'sflag constant byte address 0x0 - dummy sync flag']
  #allocation10 [shape = 'u32[]', space=smem, size = 0x4, offset = 0x44, fixed_abs, tag = 'smem constant byte address 0x44 - assertion arg 0']
  #allocation11 [shape = 'u32[]', space=smem, size = 0x4, offset = 0x48, fixed_abs, tag = 'smem constant byte address 0x48 - assertion arg 1']
  #allocation12 [shape = 's32[]', space=sflag, size = 0x4, offset = 0, fixed_abs, tag = 'sflag constant byte address 0x0 - dummy sync flag']
  #allocation13 [shape = 's32[]', space=sflag, size = 0x4, offset = 0, fixed_abs, tag = 'sflag constant byte address 0x0 - dummy sync flag']
  #allocation14 [shape = 's32[]', space=sflag, size = 0x4, offset = 0, fixed_abs, tag = 'sflag constant byte address 0x0 - dummy sync flag']
  #allocation15 [shape = 's32[]', space=sflag, size = 0x4, offset = 0, fixed_abs, tag = 'sflag constant byte address 0x0 - dummy sync flag']
  #allocation16 [shape = 's32[]', space=sflag, size = 0x4, offset = 0, fixed_abs, tag = 'sflag constant byte address 0x0 - dummy sync flag']
  #allocation17 [shape = 's32[]', space=sflag, size = 0x4, offset = 0, fixed_abs, tag = 'sflag constant byte address 0x0 - dummy sync flag']
  #allocation18 [shape = 's32[]', space=sflag, size = 0x4, offset = 0, fixed_abs, tag = 'sflag constant byte address 0x0 - dummy sync flag']
  #allocation19 [shape = 's32[]', space=sflag, size = 0x4, offset = 0, fixed_abs, tag = 'sflag constant byte address 0x0 - dummy sync flag']
  #allocation20 [shape = 's32[]', space=sflag, size = 0x4, offset = 0, fixed_abs, tag = 'sflag constant byte address 0x0 - dummy sync flag']
  #allocation21 [shape = 's32[]', space=sflag, size = 0x4, offset = 0, fixed_abs, tag = 'sflag constant byte address 0x0 - dummy sync flag']
  #allocation22 [shape = 's32[]', space=sflag, size = 0x4, offset = 0, fixed_abs, tag = 'sflag constant byte address 0x0 - dummy sync flag']
  #allocation23 [shape = 's32[]', space=sflag, size = 0x4, offset = 0, fixed_abs, tag = 'sflag constant byte address 0x0 - dummy sync flag']
  #allocation24 [shape = 's32[]', space=sflag, size = 0x4, offset = 0, fixed_abs, tag = 'sflag constant byte address 0x0 - dummy sync flag']
  #allocation25 [shape = 's32[]', space=sflag, size = 0x4, offset = 0, fixed_abs, tag = 'sflag constant byte address 0x0 - dummy sync flag']
  %s0 = inlined_call_operand.hbm [shape: s32[16], index: 0, kind: input, shape index: {}]
  %s1 = inlined_call_operand.hbm [shape: f32[64,128], index: 1, kind: input, shape index: {}]
  %s2 = inlined_call_operand.hbm [shape: f32[16,128], index: 2, kind: output, shape index: {}]
  %s3 = sld [smem:[#allocation0]]
  $region57: #{tpu_custom_call.1} parent=0
    _
  %s5 = ssub.s32 1, %s3
  %s6 = scalar_select 0, %s5, %s3
  %s8 = sshll.u32 %s0, 4
  %s9 = int_to_ptr.hbm [resolvable:$true] %s8
  %11 = dma.hbm_to_smem %s9, 16, [#allocation5], [#allocation4]
  %13 = dma.done [#allocation4], 16
  %14 = sfence
  $region1: #{tpu_custom_call.1} parent=0
    #allocation6 [shape = 'u8[8192]{0}', space=vmem, size = 0x2000, scoped, tag = 'output window, operand 0']
    #allocation7 [shape = 's32[2]{0}', space=sflag, size = 0x8, scoped, tag = 'scoped memory for tpu_custom_call.1']
    %15 = vsyncpa [#allocation7], 0
    %s16 = scalar_lea.sflag [#allocation7], 1
    %17 = vsyncpa %s16, 0
    loop: start=0, step=1, limit=3
    $region2: #{tpu_custom_call.1} parent=1 // loop_pre_header
      _
    $region3: #{tpu_custom_call.1} parent=1 // loop_header
      %s19 = sphi 0, %s23
      %p20 = scmp.ge.s32.totalorder %s19, 3
      %s28 = sphi 0, %s30
      %s31 = sphi 0, %s28
      %s41 = sphi 0, %s31
    $region4: #{tpu_custom_call.1} parent=1 // loop_header_branch
      %22 = sbr.rel (%p20) target = $region8
    $region5: #{tpu_custom_call.1} parent=1 // loop_body
      %s24 = ssub.s32 %s19, 1
      %s25 = sadd.s32 %s19, 1
      %s26 = ssub.s32 %s19, %s25
      %p27 = scmp.eq.s32.totalorder %s26, 0
      %s29 = sadd.s32 %s28, 1
      %s30 = scalar_select %p27, %s28, %s29
      %p32 = pneg %p27
      %p33 = scmp.eq.s32.totalorder %s19, 1
      %p34 = por %p32, %p33
      %p35 = scmp.ne.s32.totalorder %s28, %s31
      %p36 = scmp.eq.s32.totalorder %s19, 0
      %p37 = por %p35, %p36
      %p38 = scmp.ne.s32.totalorder %s28, %s31
      %p39 = scmp.eq.s32.totalorder %s24, 1
      %p40 = por %p38, %p39
      %p42 = scmp.ne.s32.totalorder %s31, %s41
      %p43 = scmp.eq.s32.totalorder %s24, 0
      %p44 = por %p42, %p43
      %p45 = scmp.lt.s32.totalorder %s19, 2
      // Predicated region
      $region9: #{tpu_custom_call.1} parent=5 // pred_check
        %p46 = pneg %p45
      $region10: #{tpu_custom_call.1} parent=5 // pred_check_branch
        %48 = sbr.rel (%p46) target = $region12
      $region11: #{tpu_custom_call.1} parent=5 // pred_region
        %p49 = pneg %p37
        %p50 = pneg %p34
        %s51 = sand.u32 %s28, 1
        %s52 = scalar_lea.sflag [#allocation7], %s51
        %s53 = sand.u32 %s28, 1
        %s54 = smul.addr %s53, 8
        %s55 = scalar_lea.vmem [#allocation6], %s54
        %s56 = smul.u32 %s19, 8
        %s57 = sld [smem:[#allocation5 + %s56]]
        %s58 = scalar_lea.hbm %s1, %s57
        // Predicated region
        $region13: #{tpu_custom_call.1} parent=11 // pred_check
          _
        $region14: #{tpu_custom_call.1} parent=11 // pred_check_branch
          %60 = sbr.rel target = $region16
        $region15: #{tpu_custom_call.1} parent=11 // pred_region
          %61 = sst [smem:[#allocation10]] [#allocation9]
          %62 = sst [smem:[#allocation11]] [#allocation8]
        $region16: #{tpu_custom_call.1} parent=11 // pred_fallthru
          _
        %64 = shalt.err (0)
        %s66 = sshll.u32 %s58, 4
        %s67 = int_to_ptr.hbm [resolvable:$true] %s66
        %s68 = sshll.u32 [#allocation2], 4
        %s69 = int_to_ptr.vmem [resolvable:$true] %s68
        %71 = dma.hbm_to_vmem [thread:$0]  %s67, 16, %s69, [#allocation3]
        %s72 = sadd.s32 %s56, 1
        %s73 = sld [smem:[#allocation5 + %s72]]
        %s74 = scalar_lea.hbm %s1, %s73
        %s75 = scalar_lea.vmem [#allocation2], 1
        %s76 = scalar_lea.sflag [#allocation3], 1
        // Predicated region
        $region17: #{tpu_custom_call.1} parent=11 // pred_check
          _
        $region18: #{tpu_custom_call.1} parent=11 // pred_check_branch
          %78 = sbr.rel target = $region20
        $region19: #{tpu_custom_call.1} parent=11 // pred_region
          %79 = sst [smem:[#allocation10]] [#allocation13]
          %80 = sst [smem:[#allocation11]] [#allocation12]
        $region20: #{tpu_custom_call.1} parent=11 // pred_fallthru
          _
        %82 = shalt.err (0)
        %s84 = sshll.u32 %s74, 4
        %s85 = int_to_ptr.hbm [resolvable:$true] %s84
        %s86 = sshll.u32 %s75, 4
        %s87 = int_to_ptr.vmem [resolvable:$true] %s86
        %89 = dma.hbm_to_vmem [thread:$0]  %s85, 16, %s87, %s76
        %s90 = sadd.s32 %s56, 2
        %s91 = sld [smem:[#allocation5 + %s90]]
        %s92 = scalar_lea.hbm %s1, %s91
        %s93 = scalar_lea.vmem [#allocation2], 2
        %s94 = scalar_lea.sflag [#allocation3], 2
        // Predicated region
        $region21: #{tpu_custom_call.1} parent=11 // pred_check
          _
        $region22: #{tpu_custom_call.1} parent=11 // pred_check_branch
          %96 = sbr.rel target = $region24
        $region23: #{tpu_custom_call.1} parent=11 // pred_region
          %97 = sst [smem:[#allocation10]] [#allocation15]
          %98 = sst [smem:[#allocation11]] [#allocation14]
        $region24: #{tpu_custom_call.1} parent=11 // pred_fallthru
          _
        %100 = shalt.err (0)
        %s102 = sshll.u32 %s92, 4
        %s103 = int_to_ptr.hbm [resolvable:$true] %s102
        %s104 = sshll.u32 %s93, 4
        %s105 = int_to_ptr.vmem [resolvable:$true] %s104
        %107 = dma.hbm_to_vmem [thread:$0]  %s103, 16, %s105, %s94
        %s108 = sadd.s32 %s56, 3
        %s109 = sld [smem:[#allocation5 + %s108]]
        %s110 = scalar_lea.hbm %s1, %s109
        %s111 = scalar_lea.vmem [#allocation2], 3
        %s112 = scalar_lea.sflag [#allocation3], 3
        // Predicated region
        $region25: #{tpu_custom_call.1} parent=11 // pred_check
          _
        $region26: #{tpu_custom_call.1} parent=11 // pred_check_branch
          %114 = sbr.rel target = $region28
        $region27: #{tpu_custom_call.1} parent=11 // pred_region
          %115 = sst [smem:[#allocation10]] [#allocation17]
          %116 = sst [smem:[#allocation11]] [#allocation16]
        $region28: #{tpu_custom_call.1} parent=11 // pred_fallthru
          _
        %118 = shalt.err (0)
        %s120 = sshll.u32 %s110, 4
        %s121 = int_to_ptr.hbm [resolvable:$true] %s120
        %s122 = sshll.u32 %s111, 4
        %s123 = int_to_ptr.vmem [resolvable:$true] %s122
        %125 = dma.hbm_to_vmem [thread:$0]  %s121, 16, %s123, %s112
        %s126 = sadd.s32 %s56, 4
        %s127 = sld [smem:[#allocation5 + %s126]]
        %s128 = scalar_lea.hbm %s1, %s127
        %s129 = scalar_lea.vmem [#allocation2], 4
        %s130 = scalar_lea.sflag [#allocation3], 4
        // Predicated region
        $region29: #{tpu_custom_call.1} parent=11 // pred_check
          _
        $region30: #{tpu_custom_call.1} parent=11 // pred_check_branch
          %132 = sbr.rel target = $region32
        $region31: #{tpu_custom_call.1} parent=11 // pred_region
          %133 = sst [smem:[#allocation10]] [#allocation19]
          %134 = sst [smem:[#allocation11]] [#allocation18]
        $region32: #{tpu_custom_call.1} parent=11 // pred_fallthru
          _
        %136 = shalt.err (0)
        %s138 = sshll.u32 %s128, 4
        %s139 = int_to_ptr.hbm [resolvable:$true] %s138
        %s140 = sshll.u32 %s129, 4
        %s141 = int_to_ptr.vmem [resolvable:$true] %s140
        %143 = dma.hbm_to_vmem [thread:$0]  %s139, 16, %s141, %s130
        %s144 = sadd.s32 %s56, 5
        %s145 = sld [smem:[#allocation5 + %s144]]
        %s146 = scalar_lea.hbm %s1, %s145
        %s147 = scalar_lea.vmem [#allocation2], 5
        %s148 = scalar_lea.sflag [#allocation3], 5
        // Predicated region
        $region33: #{tpu_custom_call.1} parent=11 // pred_check
          _
        $region34: #{tpu_custom_call.1} parent=11 // pred_check_branch
          %150 = sbr.rel target = $region36
        $region35: #{tpu_custom_call.1} parent=11 // pred_region
          %151 = sst [smem:[#allocation10]] [#allocation21]
          %152 = sst [smem:[#allocation11]] [#allocation20]
        $region36: #{tpu_custom_call.1} parent=11 // pred_fallthru
          _
        %154 = shalt.err (0)
        %s156 = sshll.u32 %s146, 4
        %s157 = int_to_ptr.hbm [resolvable:$true] %s156
        %s158 = sshll.u32 %s147, 4
        %s159 = int_to_ptr.vmem [resolvable:$true] %s158
        %161 = dma.hbm_to_vmem [thread:$0]  %s157, 16, %s159, %s148
        %s162 = sadd.s32 %s56, 6
        %s163 = sld [smem:[#allocation5 + %s162]]
        %s164 = scalar_lea.hbm %s1, %s163
        %s165 = scalar_lea.vmem [#allocation2], 6
        %s166 = scalar_lea.sflag [#allocation3], 6
        // Predicated region
        $region37: #{tpu_custom_call.1} parent=11 // pred_check
          _
        $region38: #{tpu_custom_call.1} parent=11 // pred_check_branch
          %168 = sbr.rel target = $region40
        $region39: #{tpu_custom_call.1} parent=11 // pred_region
          %169 = sst [smem:[#allocation10]] [#allocation23]
          %170 = sst [smem:[#allocation11]] [#allocation22]
        $region40: #{tpu_custom_call.1} parent=11 // pred_fallthru
          _
        %172 = shalt.err (0)
        %s174 = sshll.u32 %s164, 4
        %s175 = int_to_ptr.hbm [resolvable:$true] %s174
        %s176 = sshll.u32 %s165, 4
        %s177 = int_to_ptr.vmem [resolvable:$true] %s176
        %179 = dma.hbm_to_vmem [thread:$0]  %s175, 16, %s177, %s166
        %s180 = sadd.s32 %s56, 7
        %s181 = sld [smem:[#allocation5 + %s180]]
        %s182 = scalar_lea.hbm %s1, %s181
        %s183 = scalar_lea.vmem [#allocation2], 7
        %s184 = scalar_lea.sflag [#allocation3], 7
        // Predicated region
        $region41: #{tpu_custom_call.1} parent=11 // pred_check
          _
        $region42: #{tpu_custom_call.1} parent=11 // pred_check_branch
          %186 = sbr.rel target = $region44
        $region43: #{tpu_custom_call.1} parent=11 // pred_region
          %187 = sst [smem:[#allocation10]] [#allocation25]
          %188 = sst [smem:[#allocation11]] [#allocation24]
        $region44: #{tpu_custom_call.1} parent=11 // pred_fallthru
          _
        %190 = shalt.err (0)
        %s192 = sshll.u32 %s182, 4
        %s193 = int_to_ptr.hbm [resolvable:$true] %s192
        %s194 = sshll.u32 %s183, 4
        %s195 = int_to_ptr.vmem [resolvable:$true] %s194
        %197 = dma.hbm_to_vmem [thread:$0]  %s193, 16, %s195, %s184
        %199 = dma.done [#allocation3], 16
        %201 = dma.done %s76, 16
        %203 = dma.done %s94, 16
        %205 = dma.done %s112, 16
        %207 = dma.done %s130, 16
        %209 = dma.done %s148, 16
        %211 = dma.done %s166, 16
        %213 = dma.done %s184, 16
        %v214 = vld [vmem:[#allocation2] sm:$0xff]
        %215 = vst [vmem:[%s55] sm:$0xff] %v214
        %s216 = sand.u32 %s28, 1
        %s217 = scalar_lea.sflag [#allocation7], %s216
        %s218 = sand.u32 %s28, 1
        %s219 = smul.addr %s218, 8
        %s220 = scalar_lea.vmem [#allocation6], %s219
        // Predicated region
        $region45: #{tpu_custom_call.1} parent=11 // pred_check
          %p221 = pneg %p34
        $region46: #{tpu_custom_call.1} parent=11 // pred_check_branch
          %223 = sbr.rel (%p221) target = $region48
        $region47: #{tpu_custom_call.1} parent=11 // pred_region
          %225 = vsyncadd %s217, 0
          %s226 = smul.addr %s19, 8
          %s227 = scalar_lea.hbm %s2, %s226
          %s229 = sshll.u32 %s220, 4
          %s230 = int_to_ptr.vmem [resolvable:$true] %s229
          %s231 = sshll.u32 %s227, 4
          %s232 = int_to_ptr.hbm [resolvable:$true] %s231
          %234 = dma.vmem_to_hbm [thread:$0]  %s230, 128, %s232, %s217
        $region48: #{tpu_custom_call.1} parent=11 // pred_fallthru
          _
      $region12: #{tpu_custom_call.1} parent=5 // pred_fallthru
        _
      %p235 = scmp.le.s32.totalorder 1, %s19
      // Predicated region
      $region49: #{tpu_custom_call.1} parent=5 // pred_check
        %p236 = pneg %p235
      $region50: #{tpu_custom_call.1} parent=5 // pred_check_branch
        %238 = sbr.rel (%p236) target = $region52
      $region51: #{tpu_custom_call.1} parent=5 // pred_region
        %s239 = ssub.s32 %s19, 1
        // Predicated region
        $region53: #{tpu_custom_call.1} parent=51 // pred_check
          %p240 = pneg %p40
        $region54: #{tpu_custom_call.1} parent=51 // pred_check_branch
          %242 = sbr.rel (%p240) target = $region56
        $region55: #{tpu_custom_call.1} parent=51 // pred_region
          %s243 = sand.u32 %s31, 1
          %s244 = scalar_lea.sflag [#allocation7], %s243
          %s245 = sand.u32 %s31, 1
          %s246 = smul.addr %s245, 8
          %s247 = scalar_lea.vmem [#allocation6], %s246
          %249 = dma.done %s244, 128
        $region56: #{tpu_custom_call.1} parent=51 // pred_fallthru
          _
      $region52: #{tpu_custom_call.1} parent=5 // pred_fallthru
        _
    $region6: #{tpu_custom_call.1} parent=1 // loop_footer
      %s23 = sadd.s32 1, %s19
    $region7: #{tpu_custom_call.1} parent=1 // loop_footer_branch
      %18 = sbr.rel target = $region3
    $region8: #{tpu_custom_call.1} parent=1 // loop_exit
      _
    %250 = vsyncpa [#allocation7], 1
    %s251 = scalar_lea.sflag [#allocation7], 1
    %252 = vsyncpa %s251, 1
  %253 = vsyncmov [#allocation3]
  %s254 = vpop.sfrf %253
  %p255 = scmp.eq.s32.totalorder %s254, 0
  %p256 = pneg %p255
  %258 = shalt.err (%p256)
  %s259 = scalar_lea.sflag [#allocation3], 1
  %260 = vsyncmov %s259
  %s261 = vpop.sfrf %260
  %p262 = scmp.eq.s32.totalorder %s261, 0
  %p263 = pneg %p262
  %265 = shalt.err (%p263)
  %s266 = scalar_lea.sflag [#allocation3], 2
  %267 = vsyncmov %s266
  %s268 = vpop.sfrf %267
  %p269 = scmp.eq.s32.totalorder %s268, 0
  %p270 = pneg %p269
  %272 = shalt.err (%p270)
  %s273 = scalar_lea.sflag [#allocation3], 3
  %274 = vsyncmov %s273
  %s275 = vpop.sfrf %274
  %p276 = scmp.eq.s32.totalorder %s275, 0
  %p277 = pneg %p276
  %279 = shalt.err (%p277)
  %s280 = scalar_lea.sflag [#allocation3], 4
  %281 = vsyncmov %s280
  %s282 = vpop.sfrf %281
  %p283 = scmp.eq.s32.totalorder %s282, 0
  %p284 = pneg %p283
  %286 = shalt.err (%p284)
  %s287 = scalar_lea.sflag [#allocation3], 5
  %288 = vsyncmov %s287
  %s289 = vpop.sfrf %288
  %p290 = scmp.eq.s32.totalorder %s289, 0
  %p291 = pneg %p290
  %293 = shalt.err (%p291)
  %s294 = scalar_lea.sflag [#allocation3], 6
  %295 = vsyncmov %s294
  %s296 = vpop.sfrf %295
  %p297 = scmp.eq.s32.totalorder %s296, 0
  %p298 = pneg %p297
  %300 = shalt.err (%p298)
  %s301 = scalar_lea.sflag [#allocation3], 7
  %302 = vsyncmov %s301
  %s303 = vpop.sfrf %302
  %p304 = scmp.eq.s32.totalorder %s303, 0
  %p305 = pneg %p304
  %307 = shalt.err (%p305)

</llo_original>
